<compile_context>
chip_gen: v6e
topology: v6e:2x2x1
jax: 0.10.0
libtpu: 0.0.40
codegen_flags: <defaults>
</compile_context>

<pallas_src>
import jax
import jax.numpy as jnp
from jax import lax
from jax.experimental import pallas as pl
from jax.experimental.pallas import tpu as pltpu


def _gather_tile_kernel(idx_ref, w_ref, o_ref):
    """Gather one tile of embedding rows from the VMEM-resident table.

    idx_ref: (n_pad,) int32 in SMEM (scalar-prefetched flattened indices)
    w_ref:   (feature_num, row_elems) f32 in VMEM (whole table, fetched once)
    o_ref:   (tile_rows, row_elems) f32 output tile
    """
    tile_rows = o_ref.shape[0]
    feature_num = w_ref.shape[0]
    base = pl.program_id(0) * tile_rows

    def body(r, carry):
        # Clamp like jnp.take's gather (no in-kernel bounds fault on bad input).
        f = jnp.minimum(idx_ref[base + r], feature_num - 1)
        o_ref[pl.ds(r, 1), :] = w_ref[pl.ds(f, 1), :]
        return carry

    lax.fori_loop(0, tile_rows, body, 0)


def embedding3d_forward(weights, x, *, rows_per_step=256):
    """Pallas equivalent of Embedding3d.forward."""
    feature_num, field_num, latent_num = weights.shape
    row_elems = field_num * latent_num

    # Lane-dense table: one embedding row == one contiguous (row_elems,) slab.
    w2d = weights.reshape(feature_num, row_elems)

    idx = x.reshape(-1).astype(jnp.int32)          # x.flatten(), like torch
    n = idx.shape[0]                               # = batch * field_num

    # Rows per grid step: multiple of 8 (sublane), capped by rows_per_step.
    t = min(rows_per_step, max(8, ((n + 7) // 8) * 8))
    n_pad = ((n + t - 1) // t) * t
    idx_p = jnp.pad(idx, (0, n_pad - n))           # pad with 0 (a valid row)

    out2d = pl.pallas_call(
        _gather_tile_kernel,
        out_shape=jax.ShapeDtypeStruct((n_pad, row_elems), weights.dtype),
        grid_spec=pltpu.PrefetchScalarGridSpec(
            num_scalar_prefetch=1,
            grid=(n_pad // t,),
            in_specs=[
                # Whole table as one block with a constant block index:
                # DMA'd HBM->VMEM once, then resident for every grid step.
                pl.BlockSpec((feature_num, row_elems),
                             lambda i, idx_ref: (0, 0)),
            ],
            out_specs=pl.BlockSpec((t, row_elems),
                                   lambda i, idx_ref: (i, 0)),
        ),
        compiler_params=pltpu.CompilerParams(
            # Disjoint output rows per step -> safe to shard across TCs (v7x).
            dimension_semantics=("parallel",),
            # Headroom for larger resident tables; safe on v5e/v6e/v7x.
            vmem_limit_bytes=48 * 1024 * 1024,
        ),
    )(idx_p, w2d)

    # Drop padded rows; .view(-1, field_num, field_num, latent_num)
    return out2d[:n].reshape(-1, field_num, field_num, latent_num)


if __name__ == "__main__":
    # Small, deterministic shapes consistent with the module.
    feature_num, field_num, latent_num = 32, 4, 8
    batch = 2

    key = jax.random.PRNGKey(0)
    k_w, k_x = jax.random.split(key)

    # torch.rand -> uniform [0, 1)
    weights = jax.random.uniform(
        k_w, (feature_num, field_num, latent_num), dtype=jnp.float32)
    x = jax.random.randint(
        k_x, (batch, field_num), minval=0, maxval=feature_num, dtype=jnp.int32)

    out = embedding3d_forward(weights, x)
    out = jax.block_until_ready(out)

    # Reference in plain JAX (same semantics as torch.index_select + view).
    ref = jnp.take(weights, x.reshape(-1), axis=0).reshape(
        -1, field_num, field_num, latent_num)

    assert out.shape == (batch, field_num, field_num, latent_num), out.shape
    assert out.dtype == jnp.float32
    assert jnp.allclose(out, ref), "Pallas gather mismatch vs reference"

    print("KERNEL_OK")
</pallas_src>

<mosaic_0001>
module attributes {stable_mosaic.version = 11 : i64} {
  func.func @_gather_tile_kernel(%arg0: i32, %arg1: memref<8xi32, #tpu.memory_space<smem>>, %arg2: memref<32x32xf32, #tpu.memory_space<vmem>>, %arg3: memref<8x32xf32, #tpu.memory_space<vmem>>) attributes {dimension_semantics = [#tpu.dimension_semantics<parallel>], iteration_bounds = array<i64: 1>, scalar_prefetch = 1 : i64, scratch_operands = 0 : i64, tpu.core_type = #tpu.core_type<tc>, window_params = [{pipeline_mode = #tpu.pipeline_mode<synchronous>, transform_indices = @transform_0, window_bounds = array<i64: 32, 32>}, {transform_indices = @transform_1, window_bounds = array<i64: 8, 32>}]} {
    %c8_i32 = arith.constant 8 : i32
    %0 = arith.muli %arg0, %c8_i32 : i32
    %c0_i32 = arith.constant 0 : i32
    %c8_i32_0 = arith.constant 8 : i32
    %1 = arith.addi %c0_i32, %c8_i32_0 : i32
    %c1_i32 = arith.constant 1 : i32
    scf.for %arg4 = %c0_i32 to %1 step %c1_i32  : i32 {
      %2 = arith.addi %0, %arg4 : i32
      %3 = arith.index_cast %2 : i32 to index
      %4 = memref.load %arg1[%3] : memref<8xi32, #tpu.memory_space<smem>>
      %c31_i32 = arith.constant 31 : i32
      %5 = arith.minsi %4, %c31_i32 : i32
      %6 = arith.index_cast %5 : i32 to index
      %c0 = arith.constant 0 : index
      %7 = vector.load %arg2[%6, %c0] : memref<32x32xf32, #tpu.memory_space<vmem>>, vector<1x32xf32>
      %8 = arith.index_cast %arg4 : i32 to index
      %c0_2 = arith.constant 0 : index
      %9 = vector.load %arg3[%8, %c0_2] : memref<8x32xf32, #tpu.memory_space<vmem>>, vector<1x32xf32>
      tpu.vector_store %arg3[%8, %c0_2], %7 {strides = array<i32>} : memref<8x32xf32, #tpu.memory_space<vmem>>, vector<1x32xf32>,
    }
    %c8_i32_1 = arith.constant 8 : i32
    return
  }
  func.func @transform_0(%arg0: i32, %arg1: memref<8xi32, #tpu.memory_space<smem>>) -> (i32, i32) {
    %c0_i32 = arith.constant 0 : i32
    %c0_i32_0 = arith.constant 0 : i32
    %c0_i32_1 = arith.constant 0 : i32
    return %c0_i32, %c0_i32_0 : i32, i32
  }
  func.func @transform_1(%arg0: i32, %arg1: memref<8xi32, #tpu.memory_space<smem>>) -> (i32, i32) {
    %c0_i32 = arith.constant 0 : i32
    %c0_i32_0 = arith.constant 0 : i32
    return %arg0, %c0_i32 : i32, i32
  }
}

</mosaic_0001>

<llo_original>
// kernel: tpu_custom_call.1
$region0: #{tpu_custom_call.1}
  #allocation0 [shape = 'u32[]', space=smem, size = 0x4, offset = 0x4, fixed_abs, tag = 'smem constant byte address 0x4 - core index']
  #allocation1 [shape = 'u32[144,128]{1,0:T(1,128)}', space=vmem, size = 0x12000, scoped, tag = 'internal scratch']
  #allocation2 [shape = 's32[1]{0}', space=sflag, size = 0x4, scoped, tag = 'scoped memory for tpu_custom_call.1']
  #allocation3 [shape = 'u8[512]{0}', space=smem, size = 0x200, scoped, tag = 'prefetched SMEM operand 0']
  %s0 = inlined_call_operand.hbm [shape: s32[8], index: 0, kind: input, shape index: {}]
  %s1 = inlined_call_operand.hbm [shape: f32[32,32], index: 1, kind: input, shape index: {}]
  %s2 = inlined_call_operand.hbm [shape: f32[8,32], index: 2, kind: output, shape index: {}]
  %s3 = sld [smem:[#allocation0]]
  $region25: #{tpu_custom_call.1} parent=0
    _
  %s5 = ssub.s32 1, %s3
  %s6 = scalar_select 0, %s5, %s3
  %8 = dma.hbm_to_smem %s0, 16, [#allocation3], [#allocation2]
  %9 = dma.done [#allocation2], 16
  %10 = sfence
  $region1: #{tpu_custom_call.1} parent=0
    #allocation4 [shape = 'u8[16384]{0}', space=vmem, size = 0x4000, scoped, tag = 'input window, operand 1, single buffered']
    #allocation5 [shape = 's32[1]{0}', space=sflag, size = 0x4, scoped, tag = 'scoped memory for tpu_custom_call.1']
    #allocation6 [shape = 's32[1]{0}', space=sflag, size = 0x4, scoped, tag = 'scoped memory for tpu_custom_call.1']
    #allocation7 [shape = 'u8[4096]{0}', space=vmem, size = 0x1000, scoped, tag = 'output window, operand 0, single buffered']
    %11 = vsyncpa [#allocation5], 0
    %12 = vsyncpa [#allocation6], 0
    // Predicated region
    $region2: #{tpu_custom_call.1} parent=1 // pred_check
      _
    $region3: #{tpu_custom_call.1} parent=1 // pred_check_branch
      %14 = sbr.rel (0) target = $region5
    $region4: #{tpu_custom_call.1} parent=1 // pred_region
      %s16 = ssub.s32 512, 512
      %17 = vsyncadd [#allocation5], %s16
      %s18 = sshll.u32 [#allocation4], 4
      %s19 = int_to_ptr.vmem [resolvable:$true] %s18
      %24 = dma.hbm_to_vmem [thread:$0]  %s1, 512, %s19, [#allocation5], 128, 128, 8
    $region5: #{tpu_custom_call.1} parent=1 // pred_fallthru
      _
    // Predicated region
    $region6: #{tpu_custom_call.1} parent=1 // pred_check
      _
    $region7: #{tpu_custom_call.1} parent=1 // pred_check_branch
      %26 = sbr.rel (0) target = $region9
    $region8: #{tpu_custom_call.1} parent=1 // pred_region
      %27 = dma.done [#allocation5], 512
    $region9: #{tpu_custom_call.1} parent=1 // pred_fallthru
      _
    %s28 = smul.u32 0, 8
    loop: start=0, step=1, limit=8
    $region10: #{tpu_custom_call.1} parent=1 // loop_pre_header
      _
    $region11: #{tpu_custom_call.1} parent=1 // loop_header
      %s30 = sphi 0, %s34
      %p31 = scmp.ge.s32.totalorder %s30, 8
    $region12: #{tpu_custom_call.1} parent=1 // loop_header_branch
      %33 = sbr.rel (%p31) target = $region16
    $region13: #{tpu_custom_call.1} parent=1 // loop_body
      %s35 = sadd.s32 %s28, %s30
      %s36 = sld [smem:[#allocation3 + %s35]]
      %p37 = scmp.lt.s32.totalorder %s36, 31
      %s38 = scalar_select %p37, %s36, 31
      %s39 = scalar_lea.vmem [#allocation4], %s38
      %v40 = vld [vmem:[%s39] sm:$0x1]
      %s41 = scalar_lea.vmem [#allocation7], %s30
      %vm42 = vcmask 253952
      %43 = vst.msk [vmem:[%s41] sm:$0x1] %vm42, %v40
    $region14: #{tpu_custom_call.1} parent=1 // loop_footer
      %s34 = sadd.s32 1, %s30
    $region15: #{tpu_custom_call.1} parent=1 // loop_footer_branch
      %29 = sbr.rel target = $region11
    $region16: #{tpu_custom_call.1} parent=1 // loop_exit
      _
    // Predicated region
    $region17: #{tpu_custom_call.1} parent=1 // pred_check
      _
    $region18: #{tpu_custom_call.1} parent=1 // pred_check_branch
      %45 = sbr.rel (0) target = $region20
    $region19: #{tpu_custom_call.1} parent=1 // pred_region
      %s47 = ssub.s32 128, 128
      %48 = vsyncadd [#allocation6], %s47
      %s50 = sshll.u32 [#allocation7], 4
      %s51 = int_to_ptr.vmem [resolvable:$true] %s50
      %53 = dma.vmem_to_hbm [thread:$0]  %s51, 128, %s2, [#allocation6]
    $region20: #{tpu_custom_call.1} parent=1 // pred_fallthru
      _
    // Predicated region
    $region21: #{tpu_custom_call.1} parent=1 // pred_check
      _
    $region22: #{tpu_custom_call.1} parent=1 // pred_check_branch
      %55 = sbr.rel (0) target = $region24
    $region23: #{tpu_custom_call.1} parent=1 // pred_region
      %56 = dma.done [#allocation6], 128
    $region24: #{tpu_custom_call.1} parent=1 // pred_fallthru
      _
    %57 = vsyncpa [#allocation5], 1
    %58 = vsyncpa [#allocation6], 1

</llo_original>
